<compile_context>
chip_gen: v6e
topology: v6e:2x2x1
jax: 0.10.0
libtpu: 0.0.40
codegen_flags: <defaults>
</compile_context>

<pallas_src>
import functools

import jax
import jax.numpy as jnp
from jax import lax
from jax.experimental import pallas as pl
from jax.experimental.pallas import tpu as pltpu


def _round_up(x, m):
    return (x + m - 1) // m * m


def _rup128(c):
    return _round_up(c, 128)


@functools.lru_cache(maxsize=None)
def _tpu_budget():
    """(vmem_limit_bytes, tm_cap) derived from the running TPU generation."""
    try:
        cap = int(pltpu.get_tpu_info().vmem_capacity_bytes)
    except Exception:
        cap = 64 * 1024 * 1024            # conservative (v7x-sized) fallback
    vmem_limit = min(cap * 3 // 4, 100 * 1024 * 1024)  # ~96MB v5e/v6e, 48MB v7x
    tm_cap = 1024 if cap >= 100 * 1024 * 1024 else 512
    return vmem_limit, tm_cap


def _pad_to(a, shape):
    pads = [(0, t - s) for s, t in zip(a.shape, shape)]
    if not any(p for _, p in pads):
        return a
    return jnp.pad(a, pads)


# ----------------------------------------------------------------------------
# Fused matmul kernel:  out = relu?( x @ w + b [+ residual] )
# residual is either a pre-computed (TM, TN) tensor (identity shortcut) or a
# second matmul r @ wd + bd fused into the same body (projection shortcut).
# ----------------------------------------------------------------------------
def _fused_matmul_kernel(apply_relu, res_mode, *refs):
    if res_mode == "proj":
        x_ref, w_ref, b_ref, r_ref, wd_ref, bd_ref, o_ref = refs
    elif res_mode == "identity":
        x_ref, w_ref, b_ref, r_ref, o_ref = refs
    else:
        x_ref, w_ref, b_ref, o_ref = refs

    acc = jnp.dot(x_ref[...], w_ref[...], preferred_element_type=jnp.float32)
    acc = acc + b_ref[...]                      # (1, TN) broadcasts over rows
    if res_mode == "proj":
        acc = acc + jnp.dot(r_ref[...], wd_ref[...],
                            preferred_element_type=jnp.float32)
        acc = acc + bd_ref[...]
    elif res_mode == "identity":
        acc = acc + r_ref[...].astype(jnp.float32)
    if apply_relu:
        acc = jnp.maximum(acc, 0.0)
    o_ref[...] = acc.astype(o_ref.dtype)


def _pick_tm(m, tm_cap):
    if m >= 8192:
        tm = tm_cap
    elif m >= 4096:
        tm = 512
    elif m >= 1024:
        tm = 256
    else:
        tm = 128
    tm = min(tm, tm_cap)
    mp = _round_up(m, tm)
    # keep >=2 M-steps when possible so both v7x TensorCores get work
    while mp // tm < 2 and tm > 128:
        tm //= 2
        mp = _round_up(m, tm)
    return tm, mp


def _pick_tn(n, k, kr=0):
    # Keep the weight block grid-invariant (resident) whenever it is small.
    if (k + kr) * n * 2 <= 8 * 1024 * 1024:
        return n
    for cand in (512, 256, 128):
        if n % cand == 0:
            return cand
    return n


def fused_matmul(x, w, b, *, res=None, res_w=None, res_b=None,
                 apply_relu=False, out_dtype=jnp.float32):
    """relu?( x @ w + b (+ residual) ) with one Pallas TPU kernel."""
    M, K = x.shape
    N = w.shape[1]
    res_mode = None if res is None else ("proj" if res_w is not None
                                         else "identity")
    vmem_limit, tm_cap = _tpu_budget()

    Kr = res.shape[1] if res_mode == "proj" else 0
    TM, Mp = _pick_tm(M, tm_cap)
    TN = _pick_tn(N, K, Kr)

    x = x.astype(jnp.bfloat16)
    w = w.astype(jnp.bfloat16)
    b2d = b.reshape(1, N).astype(jnp.float32)
    if Mp != M:
        x = jnp.pad(x, ((0, Mp - M), (0, 0)))

    grid = (Mp // TM, N // TN)
    in_specs = [
        pl.BlockSpec((TM, K), lambda i, j: (i, 0)),
        pl.BlockSpec((K, TN), lambda i, j: (0, j)),   # invariant along i
        pl.BlockSpec((1, TN), lambda i, j: (0, j)),
    ]
    args = [x, w, b2d]
    flops = 2 * Mp * K * N
    bytes_accessed = (Mp * K * 2 + K * N * 2 + N * 4
                      + Mp * N * jnp.dtype(out_dtype).itemsize)

    if res_mode == "proj":
        r = res.astype(jnp.bfloat16)
        if Mp != M:
            r = jnp.pad(r, ((0, Mp - M), (0, 0)))
        in_specs += [
            pl.BlockSpec((TM, Kr), lambda i, j: (i, 0)),
            pl.BlockSpec((Kr, TN), lambda i, j: (0, j)),
            pl.BlockSpec((1, TN), lambda i, j: (0, j)),
        ]
        args += [r, res_w.astype(jnp.bfloat16),
                 res_b.reshape(1, N).astype(jnp.float32)]
        flops += 2 * Mp * Kr * N
        bytes_accessed += Mp * Kr * 2 + Kr * N * 2 + N * 4
    elif res_mode == "identity":
        r = res.astype(jnp.bfloat16)
        if Mp != M:
            r = jnp.pad(r, ((0, Mp - M), (0, 0)))
        in_specs.append(pl.BlockSpec((TM, TN), lambda i, j: (i, j)))
        args.append(r)
        bytes_accessed += Mp * N * 2

    kernel = functools.partial(_fused_matmul_kernel, apply_relu, res_mode)
    out = pl.pallas_call(
        kernel,
        out_shape=jax.ShapeDtypeStruct((Mp, N), out_dtype),
        grid_spec=pltpu.PrefetchScalarGridSpec(
            num_scalar_prefetch=0,
            grid=grid,
            in_specs=in_specs,
            out_specs=pl.BlockSpec((TM, TN), lambda i, j: (i, j)),
        ),
        compiler_params=pltpu.CompilerParams(
            dimension_semantics=("parallel", "parallel"),
            vmem_limit_bytes=vmem_limit,
        ),
        cost_estimate=pl.CostEstimate(
            flops=int(flops), transcendentals=0,
            bytes_accessed=int(bytes_accessed)),
    )(*args)
    return out[:M] if Mp != M else out


# ----------------------------------------------------------------------------
# Generic multi-tap conv kernel (3x3 stride-1 taps, or 2x2 super-taps for the
# space-to-depth stride-2 formulation) + folded-BN bias + ReLU.
# The padded image for the current batch element is resident in VMEM; each
# grid step gathers its taps into a VMEM im2col scratch and issues one deep
# matmul (K = ntaps * C), then writes a clean (th, Wo, D) output tile.
# ----------------------------------------------------------------------------
def _conv_taps_kernel(ty_taps, tx_taps, th, wo, ceff,
                      x_ref, w_ref, b_ref, o_ref, cols_ref):
    i = pl.program_id(1)
    row0 = i * th
    for ty in range(ty_taps):
        for tx in range(tx_taps):
            t = ty * tx_taps + tx
            win = x_ref[0, pl.ds(row0 + ty, th), pl.ds(tx, wo), :]
            cols_ref[:, t * ceff:(t + 1) * ceff] = win.reshape(th * wo, ceff)
    acc = jnp.dot(cols_ref[...], w_ref[...], preferred_element_type=jnp.float32)
    acc = acc + b_ref[...]
    acc = jnp.maximum(acc, 0.0)
    d = o_ref.shape[-1]
    o_ref[0] = acc.reshape(th, wo, d).astype(o_ref.dtype)


def _pick_th(ho, wo, nb, target_rows=1024, th_cap=128):
    cap = max(1, min(th_cap, target_rows // max(wo, 1)))
    if nb == 1 and ho >= 2:
        cap = min(cap, ho // 2)   # keep >=2 grid steps so both v7x TCs work
    best = 1
    for d in range(1, ho + 1):
        if ho % d == 0 and d <= cap:
            best = d
    return best


def conv3x3_bn_relu(h1, w_hwio, b, stride, out_dtype=jnp.bfloat16):
    """3x3 conv (padding=1, stride 1 or 2) + folded-BN bias + ReLU."""
    Nb, H, W, C = h1.shape
    D = w_hwio.shape[-1]
    Ho = (H - 1) // stride + 1
    Wo = (W - 1) // stride + 1
    h1 = h1.astype(jnp.bfloat16)
    wb = w_hwio.astype(jnp.bfloat16)

    if stride == 1:
        xp = jnp.pad(h1, ((0, 0), (1, 1), (1, 1), (0, 0)))
        TY = TX = 3
        ceff = C
        w = wb.reshape(9 * C, D)                     # tap order (ky, kx, c)
        Hp, Wp = H + 2, W + 2
    elif stride == 2:
        # Space-to-depth(2): stride-2 3x3 conv == unit-stride 2x2 super-tap
        # conv on (Hp/2, Wp/2, 4C) with zero-extended 4x4 weights.
        hp0, wp0 = H + 2, W + 2
        hp1, wp1 = hp0 + (hp0 & 1), wp0 + (wp0 & 1)
        xp = jnp.pad(h1, ((0, 0), (1, hp1 - H - 1), (1, wp1 - W - 1), (0, 0)))
        Hp, Wp = hp1 // 2, wp1 // 2
        xp = xp.reshape(Nb, Hp, 2, Wp, 2, C).transpose(0, 1, 3, 2, 4, 5)
        xp = xp.reshape(Nb, Hp, Wp, 4 * C)
        TY = TX = 2
        ceff = 4 * C
        wpad = jnp.pad(wb, ((0, 1), (0, 1), (0, 0), (0, 0)))        # (4,4,C,D)
        w = wpad.reshape(2, 2, 2, 2, C, D).transpose(0, 2, 1, 3, 4, 5)
        w = w.reshape(TY * TX * ceff, D)             # tap order (dy, dx)
    else:
        raise NotImplementedError("stride must be 1 or 2")

    ntaps = TY * TX
    th = _pick_th(Ho, Wo, Nb)
    grid = (Nb, Ho // th)
    b2d = b.reshape(1, D).astype(jnp.float32)
    vmem_limit, _ = _tpu_budget()

    kernel = functools.partial(_conv_taps_kernel, TY, TX, th, Wo, ceff)
    out = pl.pallas_call(
        kernel,
        out_shape=jax.ShapeDtypeStruct((Nb, Ho, Wo, D), out_dtype),
        grid_spec=pltpu.PrefetchScalarGridSpec(
            num_scalar_prefetch=0,
            grid=grid,
            in_specs=[
                # whole padded image per batch element; block index invariant
                # along the row-tile axis -> fetched once, stays resident,
                # next batch's fetch is pipelined behind this batch's compute.
                pl.BlockSpec((1, Hp, Wp, ceff), lambda n, i: (n, 0, 0, 0)),
                pl.BlockSpec((ntaps * ceff, D), lambda n, i: (0, 0)),
                pl.BlockSpec((1, D), lambda n, i: (0, 0)),
            ],
            out_specs=pl.BlockSpec((1, th, Wo, D), lambda n, i: (n, i, 0, 0)),
            scratch_shapes=[pltpu.VMEM((th * Wo, ntaps * ceff), jnp.bfloat16)],
        ),
        compiler_params=pltpu.CompilerParams(
            dimension_semantics=("parallel", "parallel"),
            vmem_limit_bytes=vmem_limit,
        ),
        cost_estimate=pl.CostEstimate(
            flops=int(2 * Nb * Ho * Wo * ntaps * ceff * D),
            transcendentals=0,
            bytes_accessed=int(Nb * Hp * Wp * ceff * 2 + ntaps * ceff * D * 2
                               + D * 4
                               + Nb * Ho * Wo * D
                               * jnp.dtype(out_dtype).itemsize)),
    )(xp, w, b2d)
    return out


# ----------------------------------------------------------------------------
# Parameter construction (deterministic), with BN folded into conv weights.
# ----------------------------------------------------------------------------
def _fold_bn(w, gamma, beta, mean, var, eps=1e-5):
    s = gamma / jnp.sqrt(var + eps)
    t = beta - mean * s
    return w * s, t


def init_params(key, in_channels, out_channels):
    cin, cmid, cout = in_channels, out_channels, out_channels * 4
    ks = jax.random.split(key, 8)

    def bn_params(k, c):
        k1, k2, k3, k4 = jax.random.split(k, 4)
        gamma = 1.0 + 0.1 * jax.random.normal(k1, (c,), jnp.float32)
        beta = 0.1 * jax.random.normal(k2, (c,), jnp.float32)
        mean = 0.1 * jax.random.normal(k3, (c,), jnp.float32)
        var = 1.0 + 0.1 * jax.random.uniform(k4, (c,), jnp.float32)
        return gamma, beta, mean, var

    w1 = 0.2 * jax.random.normal(ks[0], (cin, cmid), jnp.float32)
    w1f, b1 = _fold_bn(w1, *bn_params(ks[1], cmid))

    w2 = 0.2 * jax.random.normal(ks[2], (3, 3, cmid, cmid), jnp.float32)
    w2f, b2 = _fold_bn(w2, *bn_params(ks[3], cmid))

    w3 = 0.2 * jax.random.normal(ks[4], (cmid, cout), jnp.float32)
    w3f, b3 = _fold_bn(w3, *bn_params(ks[5], cout))

    wd = 0.2 * jax.random.normal(ks[6], (cin, cout), jnp.float32)
    wdf, bd = _fold_bn(wd, *bn_params(ks[7], cout))

    return {"w1": w1f, "b1": b1, "w2_hwio": w2f, "b2": b2,
            "w3": w3f, "b3": b3, "wd": wdf, "bd": bd}


# ----------------------------------------------------------------------------
# Bottleneck forward.
# ----------------------------------------------------------------------------
def bottleneck_forward(x_nchw, params, in_channels, out_channels, stride=1):
    cin, cmid, cout = in_channels, out_channels, out_channels * 4
    cin_p, cmid_p, cout_p = _rup128(cin), _rup128(cmid), _rup128(cout)

    # TODO(synk): NCHW<->NHWC boundary transposes are kept because the module
    # interface is NCHW; an NHWC-native surrounding model would drop them.
    x = jnp.transpose(x_nchw, (0, 2, 3, 1)).astype(jnp.bfloat16)
    Nb, H, W, _ = x.shape
    Ho = (H - 1) // stride + 1
    Wo = (W - 1) // stride + 1

    # Lane-dense channel padding (zero channels are inert through all stages).
    xp = _pad_to(x, (Nb, H, W, cin_p))
    w1 = _pad_to(params["w1"], (cin_p, cmid_p))
    b1 = _pad_to(params["b1"], (cmid_p,))
    w2 = _pad_to(params["w2_hwio"], (3, 3, cmid_p, cmid_p))
    b2 = _pad_to(params["b2"], (cmid_p,))
    w3 = _pad_to(params["w3"], (cmid_p, cout_p))
    b3 = _pad_to(params["b3"], (cout_p,))

    # --- conv1 (1x1) + BN + ReLU ---------------------------------------------
    h1 = fused_matmul(xp.reshape(Nb * H * W, cin_p), w1, b1,
                      apply_relu=True, out_dtype=jnp.bfloat16)
    h1 = h1.reshape(Nb, H, W, cmid_p)

    # --- conv2 (3x3, stride, pad=1) + BN + ReLU ------------------------------
    h2 = conv3x3_bn_relu(h1, w2, b2, stride, out_dtype=jnp.bfloat16)
    h2 = h2.reshape(Nb * Ho * Wo, cmid_p)

    # --- conv3 (1x1) + BN + residual add + ReLU (downsample fused in) --------
    needs_downsample = (stride != 1) or (cin != cout)
    if needs_downsample:
        wd = _pad_to(params["wd"], (cin_p, cout_p))
        bd = _pad_to(params["bd"], (cout_p,))
        xs = xp[:, 0:stride * (Ho - 1) + 1:stride,
                0:stride * (Wo - 1) + 1:stride, :]
        out = fused_matmul(h2, w3, b3,
                           res=xs.reshape(Nb * Ho * Wo, cin_p),
                           res_w=wd, res_b=bd,
                           apply_relu=True, out_dtype=jnp.float32)
    else:
        out = fused_matmul(h2, w3, b3,
                           res=xp.reshape(Nb * Ho * Wo, cout_p),
                           apply_relu=True, out_dtype=jnp.float32)

    out = out.reshape(Nb, Ho, Wo, cout_p)[..., :cout]
    return jnp.transpose(out, (0, 3, 1, 2))  # back to NCHW


# ----------------------------------------------------------------------------
# Pure-JAX reference (lax conv), mirroring the bf16 operand casts.
# ----------------------------------------------------------------------------
def bottleneck_ref(x_nchw, params, in_channels, out_channels, stride=1):
    cin, cmid, cout = in_channels, out_channels, out_channels * 4
    bf = lambda a: a.astype(jnp.bfloat16).astype(jnp.float32)
    x = bf(jnp.transpose(x_nchw, (0, 2, 3, 1)).astype(jnp.float32))

    def conv(a, w_hwio, strides, padding):
        return lax.conv_general_dilated(
            a, w_hwio, strides, padding,
            dimension_numbers=("NHWC", "HWIO", "NHWC"))

    h = jax.nn.relu(conv(x, bf(params["w1"]).reshape(1, 1, cin, cmid),
                         (1, 1), "VALID") + params["b1"])
    h = bf(h)
    h = jax.nn.relu(conv(h, bf(params["w2_hwio"]), (stride, stride),
                         ((1, 1), (1, 1))) + params["b2"])
    h = bf(h)
    y = conv(h, bf(params["w3"]).reshape(1, 1, cmid, cout),
             (1, 1), "VALID") + params["b3"]
    if stride != 1 or cin != cout:
        res = conv(x, bf(params["wd"]).reshape(1, 1, cin, cout),
                   (stride, stride), "VALID") + params["bd"]
    else:
        res = x
    out = jax.nn.relu(y + res)
    return jnp.transpose(out, (0, 3, 1, 2))


# ----------------------------------------------------------------------------
if __name__ == "__main__":
    key = jax.random.PRNGKey(0)

    # (batch, in_channels, H, W, out_channels, stride)
    configs = [
        (2, 4, 16, 16, 8, 1),    # projection shortcut, stride-1 3x3
        (2, 4, 16, 16, 8, 2),    # strided block (space-to-depth 3x3)
        (2, 32, 16, 16, 8, 1),   # identity shortcut (cin == 4*out_channels)
    ]

    for cfg in configs:
        batch, cin, H, W, outc, stride = cfg
        key, k_x, k_p = jax.random.split(key, 3)
        x = jax.random.normal(k_x, (batch, cin, H, W), jnp.float32)
        params = init_params(k_p, cin, outc)

        out = jax.block_until_ready(
            bottleneck_forward(x, params, cin, outc, stride))
        ref = jax.block_until_ready(
            bottleneck_ref(x, params, cin, outc, stride))

        Ho = (H - 1) // stride + 1
        Wo = (W - 1) // stride + 1
        assert out.shape == (batch, outc * 4, Ho, Wo), (cfg, out.shape)
        max_err = float(jnp.max(jnp.abs(out - ref)))
        assert jnp.allclose(out, ref, atol=2e-2, rtol=2e-2), (cfg, max_err)

    print("KERNEL_OK")
</pallas_src>

<mosaic_0001>
module attributes {stable_mosaic.version = 11 : i64} {
  func.func @_fused_matmul_kernel(%arg0: i32, %arg1: i32, %arg2: memref<128x128xbf16, #tpu.memory_space<vmem>>, %arg3: memref<128x128xbf16, #tpu.memory_space<vmem>>, %arg4: memref<1x128xf32, #tpu.memory_space<vmem>>, %arg5: memref<128x128xbf16, #tpu.memory_space<vmem>>) attributes {dimension_semantics = [#tpu.dimension_semantics<parallel>, #tpu.dimension_semantics<parallel>], iteration_bounds = array<i64: 4, 1>, scalar_prefetch = 0 : i64, scratch_operands = 0 : i64, tpu.core_type = #tpu.core_type<tc>, window_params = [{transform_indices = @transform_0, window_bounds = array<i64: 128, 128>}, {transform_indices = @transform_1, window_bounds = array<i64: 128, 128>}, {transform_indices = @transform_2, window_bounds = array<i64: 1, 128>}, {transform_indices = @transform_3, window_bounds = array<i64: 128, 128>}]} {
    %c0 = arith.constant 0 : index
    %c0_0 = arith.constant 0 : index
    %0 = vector.load %arg2[%c0, %c0_0] : memref<128x128xbf16, #tpu.memory_space<vmem>>, vector<128x128xbf16>
    %c0_1 = arith.constant 0 : index
    %c0_2 = arith.constant 0 : index
    %1 = vector.load %arg3[%c0_1, %c0_2] : memref<128x128xbf16, #tpu.memory_space<vmem>>, vector<128x128xbf16>
    %cst = arith.constant dense<0.000000e+00> : vector<128x128xf32>
    %2 = tpu.matmul %0, %1, %cst {dimension_numbers = #tpu.dot_dimension_numbers<[1], [0], [0], [1], [0, 0, 1, 1], [], []>} : vector<128x128xbf16>, vector<128x128xbf16>, vector<128x128xf32> -> vector<128x128xf32>
    %c0_3 = arith.constant 0 : index
    %c0_4 = arith.constant 0 : index
    %3 = vector.load %arg4[%c0_3, %c0_4] : memref<1x128xf32, #tpu.memory_space<vmem>>, vector<1x128xf32>
    %4 = vector.broadcast %3 : vector<1x128xf32> to vector<128x128xf32>
    %5 = arith.addf %2, %4 : vector<128x128xf32>
    %cst_5 = arith.constant 0.000000e+00 : f32
    %6 = vector.broadcast %cst_5 : f32 to vector<128x128xf32>
    %7 = arith.maximumf %5, %6 : vector<128x128xf32>
    %8 = arith.truncf %7 : vector<128x128xf32> to vector<128x128xbf16>
    %c0_6 = arith.constant 0 : index
    %c0_7 = arith.constant 0 : index
    %9 = vector.load %arg5[%c0_6, %c0_7] : memref<128x128xbf16, #tpu.memory_space<vmem>>, vector<128x128xbf16>
    tpu.vector_store %arg5[%c0_6, %c0_7], %8 {strides = array<i32>} : memref<128x128xbf16, #tpu.memory_space<vmem>>, vector<128x128xbf16>,
    return
  }
  func.func @transform_0(%arg0: i32, %arg1: i32) -> (i32, i32) {
    %c0_i32 = arith.constant 0 : i32
    %c0_i32_0 = arith.constant 0 : i32
    return %arg0, %c0_i32 : i32, i32
  }
  func.func @transform_1(%arg0: i32, %arg1: i32) -> (i32, i32) {
    %c0_i32 = arith.constant 0 : i32
    %c0_i32_0 = arith.constant 0 : i32
    return %c0_i32, %arg1 : i32, i32
  }
  func.func @transform_2(%arg0: i32, %arg1: i32) -> (i32, i32) {
    %c0_i32 = arith.constant 0 : i32
    %c0_i32_0 = arith.constant 0 : i32
    return %c0_i32, %arg1 : i32, i32
  }
  func.func @transform_3(%arg0: i32, %arg1: i32) -> (i32, i32) {
    %c0_i32 = arith.constant 0 : i32
    return %arg0, %arg1 : i32, i32
  }
}

</mosaic_0001>

<llo_original>
// kernel: tpu_custom_call.1
$region0: #{tpu_custom_call.1}
  #allocation0 [shape = 'u32[]', space=smem, size = 0x4, offset = 0x4, fixed_abs, tag = 'smem constant byte address 0x4 - core index']
  #allocation1 [shape = 'u32[144,128]{1,0:T(1,128)}', space=vmem, size = 0x12000, scoped, tag = 'internal scratch']
  %s0 = inlined_call_operand.hbm [shape: bf16[512,128], index: 0, kind: input, shape index: {}]
  %s1 = inlined_call_operand.hbm [shape: bf16[128,128], index: 1, kind: input, shape index: {}]
  %s2 = inlined_call_operand.vmem [shape: f32[1,128], index: 2, kind: input, shape index: {}]
  %s3 = inlined_call_operand.hbm [shape: bf16[512,128], index: 3, kind: output, shape index: {}]
  %s4 = sld [smem:[#allocation0]]
  $region53: #{tpu_custom_call.1} parent=0
    _
  %s6 = ssub.s32 1, %s4
  %s7 = scalar_select 0, %s6, %s4
  $region1: #{tpu_custom_call.1} parent=0
    #allocation2 [shape = 'u8[65536]{0}', space=vmem, size = 0x10000, scoped, tag = 'input window, operand 0']
    #allocation3 [shape = 's32[2]{0}', space=sflag, size = 0x8, scoped, tag = 'scoped memory for tpu_custom_call.1']
    #allocation4 [shape = 's32[2]{0}', space=sflag, size = 0x8, scoped, tag = 'scoped memory for tpu_custom_call.1']
    #allocation5 [shape = 'u8[32768]{0}', space=vmem, size = 0x8000, scoped, tag = 'input window, operand 1, single buffered']
    #allocation6 [shape = 's32[1]{0}', space=sflag, size = 0x4, scoped, tag = 'scoped memory for tpu_custom_call.1']
    #allocation7 [shape = 'u8[65536]{0}', space=vmem, size = 0x10000, scoped, tag = 'output window, operand 0']
    %8 = vsyncpa [#allocation3], 0
    %s9 = scalar_lea.sflag [#allocation3], 1
    %10 = vsyncpa %s9, 0
    %11 = vsyncpa [#allocation6], 0
    %12 = vsyncpa [#allocation4], 0
    %s13 = scalar_lea.sflag [#allocation4], 1
    %14 = vsyncpa %s13, 0
    loop: start=0, step=1, limit=6
    $region2: #{tpu_custom_call.1} parent=1 // loop_pre_header
      _
    $region3: #{tpu_custom_call.1} parent=1 // loop_header
      %s16 = sphi 0, %s20
      %p17 = scmp.ge.s32.totalorder %s16, 6
      %s23 = sphi 0, %s35
      %s24 = sphi 0, %s31
      %s25 = sphi 0, %s23
      %s26 = sphi 0, %s24
      %s27 = sphi 0, %s25
      %s28 = sphi 0, %s26
      %s38 = sphi 0, %s40
      %s41 = sphi 0, %s38
      %s42 = sphi 0, %s41
      %s58 = sphi 0, %s42
      %s64 = sphi 0, %s66
      %s67 = sphi 0, %s64
      %s68 = sphi 0, %s67
      %s84 = sphi 0, %s68
      %s90 = sphi 0, %s92
      %s93 = sphi 0, %s90
      %s94 = sphi 0, %s93
      %s110 = sphi 0, %s94
      %s118 = sphi 0, %s120
      %s121 = sphi 0, %s118
      %s122 = sphi 0, %s121
      %s138 = sphi 0, %s122
    $region4: #{tpu_custom_call.1} parent=1 // loop_header_branch
      %19 = sbr.rel (%p17) target = $region8
    $region5: #{tpu_custom_call.1} parent=1 // loop_body
      %s21 = ssub.s32 %s16, 1
      %s22 = ssub.s32 %s16, 2
      %s29 = sadd.s32 1, %s24
      %p30 = scmp.ge.s32.totalorder %s29, 1
      %s31 = scalar_select %p30, 0, %s29
      %s32 = sadd.s32 1, %s23
      %s33 = scalar_select %p30, %s32, %s23
      %p34 = scmp.ge.s32.totalorder %s33, 4
      %s35 = scalar_select %p34, 0, %s33
      %s36 = ssub.s32 %s23, %s35
      %p37 = scmp.eq.s32.totalorder %s36, 0
      %s39 = sadd.s32 %s38, 1
      %s40 = scalar_select %p37, %s38, %s39
      %p43 = pneg %p37
      %p44 = scmp.eq.s32.totalorder %s16, 3
      %p45 = por %p43, %p44
      %p46 = scmp.ne.s32.totalorder %s38, %s41
      %p47 = scmp.eq.s32.totalorder %s16, 0
      %p48 = por %p46, %p47
      %p49 = scmp.ne.s32.totalorder %s38, %s41
      %p50 = scmp.eq.s32.totalorder %s21, 3
      %p51 = por %p49, %p50
      %p52 = scmp.ne.s32.totalorder %s41, %s42
      %p53 = scmp.eq.s32.totalorder %s21, 0
      %p54 = por %p52, %p53
      %p55 = scmp.ne.s32.totalorder %s41, %s42
      %p56 = scmp.eq.s32.totalorder %s22, 3
      %p57 = por %p55, %p56
      %p59 = scmp.ne.s32.totalorder %s42, %s58
      %p60 = scmp.eq.s32.totalorder %s22, 0
      %p61 = por %p59, %p60
      %s62 = ssub.s32 %s24, %s31
      %p63 = scmp.eq.s32.totalorder %s62, 0
      %s65 = sadd.s32 %s64, 1
      %s66 = scalar_select %p63, %s64, %s65
      %p69 = pneg %p63
      %p70 = scmp.eq.s32.totalorder %s16, 3
      %p71 = por %p69, %p70
      %p72 = scmp.ne.s32.totalorder %s64, %s67
      %p73 = scmp.eq.s32.totalorder %s16, 0
      %p74 = por %p72, %p73
      %p75 = scmp.ne.s32.totalorder %s64, %s67
      %p76 = scmp.eq.s32.totalorder %s21, 3
      %p77 = por %p75, %p76
      %p78 = scmp.ne.s32.totalorder %s67, %s68
      %p79 = scmp.eq.s32.totalorder %s21, 0
      %p80 = por %p78, %p79
      %p81 = scmp.ne.s32.totalorder %s67, %s68
      %p82 = scmp.eq.s32.totalorder %s22, 3
      %p83 = por %p81, %p82
      %p85 = scmp.ne.s32.totalorder %s68, %s84
      %p86 = scmp.eq.s32.totalorder %s22, 0
      %p87 = por %p85, %p86
      %s88 = ssub.s32 %s24, %s31
      %p89 = scmp.eq.s32.totalorder %s88, 0
      %s91 = sadd.s32 %s90, 1
      %s92 = scalar_select %p89, %s90, %s91
      %p95 = pneg %p89
      %p96 = scmp.eq.s32.totalorder %s16, 3
      %p97 = por %p95, %p96
      %p98 = scmp.ne.s32.totalorder %s90, %s93
      %p99 = scmp.eq.s32.totalorder %s16, 0
      %p100 = por %p98, %p99
      %p101 = scmp.ne.s32.totalorder %s90, %s93
      %p102 = scmp.eq.s32.totalorder %s21, 3
      %p103 = por %p101, %p102
      %p104 = scmp.ne.s32.totalorder %s93, %s94
      %p105 = scmp.eq.s32.totalorder %s21, 0
      %p106 = por %p104, %p105
      %p107 = scmp.ne.s32.totalorder %s93, %s94
      %p108 = scmp.eq.s32.totalorder %s22, 3
      %p109 = por %p107, %p108
      %p111 = scmp.ne.s32.totalorder %s94, %s110
      %p112 = scmp.eq.s32.totalorder %s22, 0
      %p113 = por %p111, %p112
      %s114 = ssub.s32 %s23, %s35
      %s115 = ssub.s32 %s24, %s31
      %s116 = sor.u32 %s114, %s115
      %p117 = scmp.eq.s32.totalorder %s116, 0
      %s119 = sadd.s32 %s118, 1
      %s120 = scalar_select %p117, %s118, %s119
      %p123 = pneg %p117
      %p124 = scmp.eq.s32.totalorder %s16, 3
      %p125 = por %p123, %p124
      %p126 = scmp.ne.s32.totalorder %s118, %s121
      %p127 = scmp.eq.s32.totalorder %s16, 0
      %p128 = por %p126, %p127
      %p129 = scmp.ne.s32.totalorder %s118, %s121
      %p130 = scmp.eq.s32.totalorder %s21, 3
      %p131 = por %p129, %p130
      %p132 = scmp.ne.s32.totalorder %s121, %s122
      %p133 = scmp.eq.s32.totalorder %s21, 0
      %p134 = por %p132, %p133
      %p135 = scmp.ne.s32.totalorder %s121, %s122
      %p136 = scmp.eq.s32.totalorder %s22, 3
      %p137 = por %p135, %p136
      %p139 = scmp.ne.s32.totalorder %s122, %s138
      %p140 = scmp.eq.s32.totalorder %s22, 0
      %p141 = por %p139, %p140
      %p142 = scmp.le.s32.totalorder 1, %s16
      %p143 = scmp.lt.s32.totalorder %s16, 5
      %p144 = pnand %p142, %p143
      %p145 = pneg %p144
      // Predicated region
      $region9: #{tpu_custom_call.1} parent=5 // pred_check
        _
      $region10: #{tpu_custom_call.1} parent=5 // pred_check_branch
        %147 = sbr.rel (%p144) target = $region12
      $region11: #{tpu_custom_call.1} parent=5 // pred_region
        %s148 = ssub.s32 %s16, 1
        // Predicated region
        $region13: #{tpu_custom_call.1} parent=11 // pred_check
          %p149 = pneg %p80
        $region14: #{tpu_custom_call.1} parent=11 // pred_check_branch
          %151 = sbr.rel (%p149) target = $region16
        $region15: #{tpu_custom_call.1} parent=11 // pred_region
          %s153 = ssub.s32 1024, 1024
          %154 = vsyncadd [#allocation6], %s153
          %s155 = smul.addr %s26, 64
          %s156 = scalar_lea.hbm %s1, %s155
          %s157 = sshll.u32 [#allocation5], 4
          %s158 = int_to_ptr.vmem [resolvable:$true] %s157
          %163 = dma.hbm_to_vmem [thread:$0]  %s156, 1024, %s158, [#allocation6], 64, 64, 4
        $region16: #{tpu_custom_call.1} parent=11 // pred_fallthru
          _
        // Predicated region
        $region17: #{tpu_custom_call.1} parent=11 // pred_check
          %p164 = pneg %p106
        $region18: #{tpu_custom_call.1} parent=11 // pred_check_branch
          %166 = sbr.rel (%p164) target = $region20
        $region19: #{tpu_custom_call.1} parent=11 // pred_region
          %p167 = scmp.lt.s32.totalorder %s26, 0
          %s168 = scalar_select %p167, %s26, 0
          %s169 = scalar_lea.vmem %s2, %s168
        $region20: #{tpu_custom_call.1} parent=11 // pred_fallthru
          _
      $region12: #{tpu_custom_call.1} parent=5 // pred_fallthru
        _
      %p170 = scmp.lt.s32.totalorder %s16, 4
      // Predicated region
      $region21: #{tpu_custom_call.1} parent=5 // pred_check
        %p171 = pneg %p170
      $region22: #{tpu_custom_call.1} parent=5 // pred_check_branch
        %173 = sbr.rel (%p171) target = $region24
      $region23: #{tpu_custom_call.1} parent=5 // pred_region
        // Predicated region
        $region25: #{tpu_custom_call.1} parent=23 // pred_check
          %p174 = pneg %p48
        $region26: #{tpu_custom_call.1} parent=23 // pred_check_branch
          %176 = sbr.rel (%p174) target = $region28
        $region27: #{tpu_custom_call.1} parent=23 // pred_region
          %s177 = sand.u32 %s38, 1
          %s178 = scalar_lea.sflag [#allocation3], %s177
          %s179 = sand.u32 %s38, 1
          %s180 = smul.addr %s179, 64
          %s181 = scalar_lea.vmem [#allocation2], %s180
          %s182 = smul.u32 16, %s23
          %s184 = ssub.s32 1024, 1024
          %185 = vsyncadd %s178, %s184
          %s186 = smul.addr %s182, 64
          %s187 = scalar_lea.hbm %s0, %s186
          %s188 = sshll.u32 %s181, 4
          %s189 = int_to_ptr.vmem [resolvable:$true] %s188
          %194 = dma.hbm_to_vmem [thread:$0]  %s187, 1024, %s189, %s178, 64, 64, 4
        $region28: #{tpu_custom_call.1} parent=23 // pred_fallthru
          _
      $region24: #{tpu_custom_call.1} parent=5 // pred_fallthru
        _
      %p195 = scmp.le.s32.totalorder 1, %s16
      %p196 = scmp.lt.s32.totalorder %s16, 5
      %p197 = pnand %p195, %p196
      %p198 = pneg %p197
      // Predicated region
      $region29: #{tpu_custom_call.1} parent=5 // pred_check
        _
      $region30: #{tpu_custom_call.1} parent=5 // pred_check_branch
        %200 = sbr.rel (%p197) target = $region32
      $region31: #{tpu_custom_call.1} parent=5 // pred_region
        %s201 = ssub.s32 %s16, 1
        %s202 = sand.u32 %s41, 1
        %s203 = scalar_lea.sflag [#allocation3], %s202
        %s204 = sand.u32 %s41, 1
        %s205 = smul.addr %s204, 64
        %s206 = scalar_lea.vmem [#allocation2], %s205
        // Predicated region
        $region33: #{tpu_custom_call.1} parent=31 // pred_check
          %p207 = pneg %p54
        $region34: #{tpu_custom_call.1} parent=31 // pred_check_branch
          %209 = sbr.rel (%p207) target = $region36
        $region35: #{tpu_custom_call.1} parent=31 // pred_region
          %210 = dma.done %s203, 1024
        $region36: #{tpu_custom_call.1} parent=31 // pred_fallthru
          _
        // Predicated region
        $region37: #{tpu_custom_call.1} parent=31 // pred_check
          %p211 = pneg %p80
        $region38: #{tpu_custom_call.1} parent=31 // pred_check_branch
          %213 = sbr.rel (%p211) target = $region40
        $region39: #{tpu_custom_call.1} parent=31 // pred_region
          %214 = dma.done [#allocation6], 1024
        $region40: #{tpu_custom_call.1} parent=31 // pred_fallthru
          _
        %s215 = sand.u32 %s41, 1
        %s216 = scalar_lea.sflag [#allocation3], %s215
        %s217 = sand.u32 %s41, 1
        %s218 = smul.addr %s217, 64
        %s219 = scalar_lea.vmem [#allocation2], %s218
        %p220 = pneg %p54
        %p221 = pneg %p51
        %p222 = pneg %p80
        %p223 = pneg %p77
        %p224 = scmp.lt.s32.totalorder %s26, 0
        %s225 = scalar_select %p224, %s26, 0
        %s226 = scalar_lea.vmem %s2, %s225
        %p227 = pneg %p106
        %p228 = pneg %p103
        %p229 = pneg %p134
        %p230 = pneg %p131
        %s231 = sand.u32 %s121, 1
        %s232 = scalar_lea.sflag [#allocation4], %s231
        %s233 = sand.u32 %s121, 1
        %s234 = smul.addr %s233, 64
        %s235 = scalar_lea.vmem [#allocation7], %s234
        %s236 = smul.u32 16, %s25
        %p237 = scmp.lt.s32.totalorder %s26, 0
        %s238 = scalar_select %p237, %s26, 0
        %s239 = scalar_lea.vmem %s2, %s238
        %s240 = smul.u32 16, %s25
        %v242 = vld [vmem:[%s206] sm:$0xf]
        %v243 = vld [vmem:[%s206 + $0x4] sm:$0xf]
        %v244 = vld [vmem:[%s206 + $0x8] sm:$0xf]
        %v245 = vld [vmem:[%s206 + $0xc] sm:$0xf]
        %v246 = vld [vmem:[%s206 + $0x10] sm:$0xf]
        %v247 = vld [vmem:[%s206 + $0x14] sm:$0xf]
        %v248 = vld [vmem:[%s206 + $0x18] sm:$0xf]
        %v249 = vld [vmem:[%s206 + $0x1c] sm:$0xf]
        %v250 = vld [vmem:[%s206 + $0x20] sm:$0xf]
        %v251 = vld [vmem:[%s206 + $0x24] sm:$0xf]
        %v252 = vld [vmem:[%s206 + $0x28] sm:$0xf]
        %v253 = vld [vmem:[%s206 + $0x2c] sm:$0xf]
        %v254 = vld [vmem:[%s206 + $0x30] sm:$0xf]
        %v255 = vld [vmem:[%s206 + $0x34] sm:$0xf]
        %v256 = vld [vmem:[%s206 + $0x38] sm:$0xf]
        %v257 = vld [vmem:[%s206 + $0x3c] sm:$0xf]
        %v258 = vld [vmem:[#allocation5] sm:$0xf]
        %v259 = vld [vmem:[#allocation5 + $0x4] sm:$0xf]
        %v260 = vld [vmem:[#allocation5 + $0x8] sm:$0xf]
        %v261 = vld [vmem:[#allocation5 + $0xc] sm:$0xf]
        %v262 = vld [vmem:[#allocation5 + $0x10] sm:$0xf]
        %v263 = vld [vmem:[#allocation5 + $0x14] sm:$0xf]
        %v264 = vld [vmem:[#allocation5 + $0x18] sm:$0xf]
        %v265 = vld [vmem:[#allocation5 + $0x1c] sm:$0xf]
        %v266 = vld [vmem:[#allocation5 + $0x20] sm:$0xf]
        %v267 = vld [vmem:[#allocation5 + $0x24] sm:$0xf]
        %v268 = vld [vmem:[#allocation5 + $0x28] sm:$0xf]
        %v269 = vld [vmem:[#allocation5 + $0x2c] sm:$0xf]
        %v270 = vld [vmem:[#allocation5 + $0x30] sm:$0xf]
        %v271 = vld [vmem:[#allocation5 + $0x34] sm:$0xf]
        %v272 = vld [vmem:[#allocation5 + $0x38] sm:$0xf]
        %v273 = vld [vmem:[#allocation5 + $0x3c] sm:$0xf]
        %v274 = vld [vmem:[%s239] sm:$0x1]
        %v276 = vlaneseq
        %v277 = vshrl.u32 %v276, 7
        %v278 = vsub.s32 0, %v277
        %v279 = vrot.slane %v274, %v278
        %v297 = vunpack.c.l.b16 %v242
        %v298 = vunpack.c.l.b16 %v243
        %v299 = vunpack.c.l.b16 %v244
        %v300 = vunpack.c.l.b16 %v245
        %v301 = vunpack.c.l.b16 %v246
        %v302 = vunpack.c.l.b16 %v247
        %v303 = vunpack.c.l.b16 %v248
        %v304 = vunpack.c.l.b16 %v249
        %v305 = vunpack.c.l.b16 %v250
        %v306 = vunpack.c.l.b16 %v251
        %v307 = vunpack.c.l.b16 %v252
        %v308 = vunpack.c.l.b16 %v253
        %v309 = vunpack.c.l.b16 %v254
        %v310 = vunpack.c.l.b16 %v255
        %v311 = vunpack.c.l.b16 %v256
        %v312 = vunpack.c.l.b16 %v257
        %v313 = vpack.c.b16 %v298, %v297
        %v314 = vpack.c.b16 %v300, %v299
        %v315 = vpack.c.b16 %v302, %v301
        %v316 = vpack.c.b16 %v304, %v303
        %v317 = vpack.c.b16 %v306, %v305
        %v318 = vpack.c.b16 %v308, %v307
        %v319 = vpack.c.b16 %v310, %v309
        %v320 = vpack.c.b16 %v312, %v311
        %v345 = vunpack.c.l.b16 %v258
        %v346 = vunpack.c.l.b16 %v259
        %v347 = vunpack.c.l.b16 %v260
        %v348 = vunpack.c.l.b16 %v261
        %v349 = vunpack.c.l.b16 %v262
        %v350 = vunpack.c.l.b16 %v263
        %v351 = vunpack.c.l.b16 %v264
        %v352 = vunpack.c.l.b16 %v265
        %v353 = vunpack.c.l.b16 %v266
        %v354 = vunpack.c.l.b16 %v267
        %v355 = vunpack.c.l.b16 %v268
        %v356 = vunpack.c.l.b16 %v269
        %v357 = vunpack.c.l.b16 %v270
        %v358 = vunpack.c.l.b16 %v271
        %v359 = vunpack.c.l.b16 %v272
        %v360 = vunpack.c.l.b16 %v273
        %v361 = vpack.c.b16 %v346, %v345
        %v362 = vpack.c.b16 %v348, %v347
        %v363 = vpack.c.b16 %v350, %v349
        %v364 = vpack.c.b16 %v352, %v351
        %v365 = vpack.c.b16 %v354, %v353
        %v366 = vpack.c.b16 %v356, %v355
        %v367 = vpack.c.b16 %v358, %v357
        %v368 = vpack.c.b16 %v360, %v359
        %377 = vmatprep.subr.bf16.mxu0 0
        %378 = vmatpush1.bf16.msra.mxu0 %v368
        %379 = vmatprep.subr.bf16.mxu0 0
        %380 = vmatpush1.bf16.msra.mxu0 %v367
        %381 = vmatprep.subr.bf16.mxu0 0
        %382 = vmatpush1.bf16.msra.mxu0 %v366
        %383 = vmatprep.subr.bf16.mxu0 0
        %384 = vmatpush1.bf16.msra.mxu0 %v365
        %385 = vmatprep.subr.bf16.mxu0 0
        %386 = vmatpush1.bf16.msra.mxu0 %v364
        %387 = vmatprep.subr.bf16.mxu0 0
        %388 = vmatpush1.bf16.msra.mxu0 %v363
        %389 = vmatprep.subr.bf16.mxu0 0
        %390 = vmatpush1.bf16.msra.mxu0 %v362
        %391 = vmatprep.subr.bf16.mxu0 0
        %392 = vmatpush1.bf16.msra.mxu0 %v361
        %393 = vmatprep.subr.bf16.mxu0 0
        %394 = vmatpush2.bf16.msra.mxu0 0
        %395 = vmatprep.subr.bf16.mxu0 0
        %396 = vmatpush2.bf16.msra.mxu0 0
        %397 = vmatprep.subr.bf16.mxu0 0
        %398 = vmatpush2.bf16.msra.mxu0 0
        %399 = vmatprep.subr.bf16.mxu0 0
        %400 = vmatpush2.bf16.msra.mxu0 0
        %401 = vmatprep.subr.bf16.mxu0 0
        %402 = vmatpush2.bf16.msra.mxu0 0
        %403 = vmatprep.subr.bf16.mxu0 0
        %404 = vmatpush2.bf16.msra.mxu0 0
        %405 = vmatprep.subr.bf16.mxu0 0
        %406 = vmatpush2.bf16.msra.mxu0 0
        %407 = vmatprep.subr.bf16.mxu0 0
        %408 = vmatpush2.bf16.msra.mxu0 0
        %409 = vmatprep.mubr.bf16.mxu0 0
        %410 = vmatmul.mubr.bf16.gmra.mxu0 %v313
        %v411 = vpop.f32.mrf.mxu0
        %v412 = vadd.f32 %v279, %v411
        %v413 = vpop.f32.mrf.mxu0
        %v414 = vpop.f32.mrf.mxu0
        %v415 = vadd.f32 %v279, %v414
        %v416 = vpop.f32.mrf.mxu0
        %417 = vmatprep.mubr.bf16.mxu0 0
        %418 = vmatmul.mubr.bf16.gmra.mxu0 %v314
        %v419 = vpop.f32.mrf.mxu0
        %v420 = vadd.f32 %v279, %v419
        %v421 = vpop.f32.mrf.mxu0
        %v422 = vpop.f32.mrf.mxu0
        %v423 = vadd.f32 %v279, %v422
        %v424 = vpop.f32.mrf.mxu0
        %425 = vmatprep.mubr.bf16.mxu0 0
        %426 = vmatmul.mubr.bf16.gmra.mxu0 %v315
        %v427 = vpop.f32.mrf.mxu0
        %v428 = vadd.f32 %v279, %v427
        %v429 = vpop.f32.mrf.mxu0
        %v430 = vpop.f32.mrf.mxu0
        %v431 = vadd.f32 %v279, %v430
        %v432 = vpop.f32.mrf.mxu0
        %433 = vmatprep.mubr.bf16.mxu0 0
        %434 = vmatmul.mubr.bf16.gmra.mxu0 %v316
        %v435 = vpop.f32.mrf.mxu0
        %v436 = vadd.f32 %v279, %v435
        %v437 = vpop.f32.mrf.mxu0
        %v438 = vpop.f32.mrf.mxu0
        %v439 = vadd.f32 %v279, %v438
        %v440 = vpop.f32.mrf.mxu0
        %441 = vmatprep.mubr.bf16.mxu0 0
        %442 = vmatmul.mubr.bf16.gmra.mxu0 %v317
        %v443 = vpop.f32.mrf.mxu0
        %v444 = vadd.f32 %v279, %v443
        %v445 = vpop.f32.mrf.mxu0
        %v446 = vpop.f32.mrf.mxu0
        %v447 = vadd.f32 %v279, %v446
        %v448 = vpop.f32.mrf.mxu0
        %449 = vmatprep.mubr.bf16.mxu0 0
        %450 = vmatmul.mubr.bf16.gmra.mxu0 %v318
        %v451 = vpop.f32.mrf.mxu0
        %v452 = vadd.f32 %v279, %v451
        %v453 = vpop.f32.mrf.mxu0
        %v454 = vpop.f32.mrf.mxu0
        %v455 = vadd.f32 %v279, %v454
        %v456 = vpop.f32.mrf.mxu0
        %457 = vmatprep.mubr.bf16.mxu0 0
        %458 = vmatmul.mubr.bf16.gmra.mxu0 %v319
        %v459 = vpop.f32.mrf.mxu0
        %v460 = vadd.f32 %v279, %v459
        %v461 = vpop.f32.mrf.mxu0
        %v462 = vpop.f32.mrf.mxu0
        %v463 = vadd.f32 %v279, %v462
        %v464 = vpop.f32.mrf.mxu0
        %465 = vmatprep.mubr.bf16.mxu0 0
        %466 = vmatmul.mubr.bf16.gmra.mxu0 %v320
        %v467 = vpop.f32.mrf.mxu0
        %v468 = vadd.f32 %v279, %v467
        %v469 = vpop.f32.mrf.mxu0
        %v470 = vpop.f32.mrf.mxu0
        %v471 = vadd.f32 %v279, %v470
        %v472 = vpop.f32.mrf.mxu0
        %473 = vdwg.mxu0
        %v474 = vmax.f32 %v412, 0.0
        %v475 = vmax.f32 %v415, 0.0
        %v476 = vmax.f32 %v420, 0.0
        %v477 = vmax.f32 %v423, 0.0
        %v478 = vmax.f32 %v428, 0.0
        %v479 = vmax.f32 %v431, 0.0
        %v480 = vmax.f32 %v436, 0.0
        %v481 = vmax.f32 %v439, 0.0
        %v482 = vmax.f32 %v444, 0.0
        %v483 = vmax.f32 %v447, 0.0
        %v484 = vmax.f32 %v452, 0.0
        %v485 = vmax.f32 %v455, 0.0
        %v486 = vmax.f32 %v460, 0.0
        %v487 = vmax.f32 %v463, 0.0
        %v488 = vmax.f32 %v468, 0.0
        %v489 = vmax.f32 %v471, 0.0
        %v490 = vpack.c.bf16 %v475, %v474
        %v491 = vpack.c.bf16 %v477, %v476
        %v492 = vpack.c.bf16 %v479, %v478
        %v493 = vpack.c.bf16 %v481, %v480
        %v494 = vpack.c.bf16 %v483, %v482
        %v495 = vpack.c.bf16 %v485, %v484
        %v496 = vpack.c.bf16 %v487, %v486
        %v497 = vpack.c.bf16 %v489, %v488
        %v506 = vunpack.c.l.b16 %v490
        %v507 = vunpack.c.h.b16 %v490
        %v508 = vunpack.c.l.b16 %v491
        %v509 = vunpack.c.h.b16 %v491
        %v510 = vunpack.c.l.b16 %v492
        %v511 = vunpack.c.h.b16 %v492
        %v512 = vunpack.c.l.b16 %v493
        %v513 = vunpack.c.h.b16 %v493
        %v514 = vunpack.c.l.b16 %v494
        %v515 = vunpack.c.h.b16 %v494
        %v516 = vunpack.c.l.b16 %v495
        %v517 = vunpack.c.h.b16 %v495
        %v518 = vunpack.c.l.b16 %v496
        %v519 = vunpack.c.h.b16 %v496
        %v520 = vunpack.c.l.b16 %v497
        %v521 = vunpack.c.h.b16 %v497
        %v522 = vpack.c.b16 %v506, %v506
        %v523 = vpack.c.b16 %v507, %v507
        %v524 = vpack.c.b16 %v508, %v508
        %v525 = vpack.c.b16 %v509, %v509
        %v526 = vpack.c.b16 %v510, %v510
        %v527 = vpack.c.b16 %v511, %v511
        %v528 = vpack.c.b16 %v512, %v512
        %v529 = vpack.c.b16 %v513, %v513
        %v530 = vpack.c.b16 %v514, %v514
        %v531 = vpack.c.b16 %v515, %v515
        %v532 = vpack.c.b16 %v516, %v516
        %v533 = vpack.c.b16 %v517, %v517
        %v534 = vpack.c.b16 %v518, %v518
        %v535 = vpack.c.b16 %v519, %v519
        %v536 = vpack.c.b16 %v520, %v520
        %v537 = vpack.c.b16 %v521, %v521
        %554 = vst [vmem:[%s235] sm:$0xf] %v522
        %555 = vst [vmem:[%s235 + $0x4] sm:$0xf] %v523
        %556 = vst [vmem:[%s235 + $0x8] sm:$0xf] %v524
        %557 = vst [vmem:[%s235 + $0xc] sm:$0xf] %v525
        %558 = vst [vmem:[%s235 + $0x10] sm:$0xf] %v526
        %559 = vst [vmem:[%s235 + $0x14] sm:$0xf] %v527
        %560 = vst [vmem:[%s235 + $0x18] sm:$0xf] %v528
        %561 = vst [vmem:[%s235 + $0x1c] sm:$0xf] %v529
        %562 = vst [vmem:[%s235 + $0x20] sm:$0xf] %v530
        %563 = vst [vmem:[%s235 + $0x24] sm:$0xf] %v531
        %564 = vst [vmem:[%s235 + $0x28] sm:$0xf] %v532
        %565 = vst [vmem:[%s235 + $0x2c] sm:$0xf] %v533
        %566 = vst [vmem:[%s235 + $0x30] sm:$0xf] %v534
        %567 = vst [vmem:[%s235 + $0x34] sm:$0xf] %v535
        %568 = vst [vmem:[%s235 + $0x38] sm:$0xf] %v536
        %569 = vst [vmem:[%s235 + $0x3c] sm:$0xf] %v537
        %s570 = sand.u32 %s121, 1
        %s571 = scalar_lea.sflag [#allocation4], %s570
        %s572 = sand.u32 %s121, 1
        %s573 = smul.addr %s572, 64
        %s574 = scalar_lea.vmem [#allocation7], %s573
        // Predicated region
        $region41: #{tpu_custom_call.1} parent=31 // pred_check
          %p575 = pneg %p131
        $region42: #{tpu_custom_call.1} parent=31 // pred_check_branch
          %577 = sbr.rel (%p575) target = $region44
        $region43: #{tpu_custom_call.1} parent=31 // pred_region
          %s578 = smul.u32 16, %s25
          %s580 = ssub.s32 1024, 1024
          %581 = vsyncadd %s571, %s580
          %s582 = sadd.s32 %s26, %s578
          %s583 = smul.addr %s582, 64
          %s584 = scalar_lea.hbm %s3, %s583
          %s585 = sshll.u32 %s574, 4
          %s586 = int_to_ptr.vmem [resolvable:$true] %s585
          %591 = dma.vmem_to_hbm [thread:$0]  %s586, 1024, %s584, %s571, 64, 64, 4
        $region44: #{tpu_custom_call.1} parent=31 // pred_fallthru
          _
      $region32: #{tpu_custom_call.1} parent=5 // pred_fallthru
        _
      %p592 = scmp.le.s32.totalorder 2, %s16
      // Predicated region
      $region45: #{tpu_custom_call.1} parent=5 // pred_check
        %p593 = pneg %p592
      $region46: #{tpu_custom_call.1} parent=5 // pred_check_branch
        %595 = sbr.rel (%p593) target = $region48
      $region47: #{tpu_custom_call.1} parent=5 // pred_region
        %s596 = ssub.s32 %s16, 2
        // Predicated region
        $region49: #{tpu_custom_call.1} parent=47 // pred_check
          %p597 = pneg %p137
        $region50: #{tpu_custom_call.1} parent=47 // pred_check_branch
          %599 = sbr.rel (%p597) target = $region52
        $region51: #{tpu_custom_call.1} parent=47 // pred_region
          %s600 = sand.u32 %s122, 1
          %s601 = scalar_lea.sflag [#allocation4], %s600
          %s602 = sand.u32 %s122, 1
          %s603 = smul.addr %s602, 64
          %s604 = scalar_lea.vmem [#allocation7], %s603
          %605 = dma.done %s601, 1024
        $region52: #{tpu_custom_call.1} parent=47 // pred_fallthru
          _
      $region48: #{tpu_custom_call.1} parent=5 // pred_fallthru
        _
    $region6: #{tpu_custom_call.1} parent=1 // loop_footer
      %s20 = sadd.s32 1, %s16
    $region7: #{tpu_custom_call.1} parent=1 // loop_footer_branch
      %15 = sbr.rel target = $region3
    $region8: #{tpu_custom_call.1} parent=1 // loop_exit
      _
    %606 = vsyncpa [#allocation3], 1
    %s607 = scalar_lea.sflag [#allocation3], 1
    %608 = vsyncpa %s607, 1
    %609 = vsyncpa [#allocation6], 1
    %610 = vsyncpa [#allocation4], 1
    %s611 = scalar_lea.sflag [#allocation4], 1
    %612 = vsyncpa %s611, 1

</llo_original>
